<compile_context>
chip_gen: v6e
topology: v6e:2x2x1
jax: 0.10.0
libtpu: 0.0.40
codegen_flags: <defaults>
</compile_context>

<pallas_src>
import functools
import math

import jax
import jax.numpy as jnp
from jax.experimental import pallas as pl
from jax.experimental.pallas import tpu as pltpu


_MAX_LANE = 8192               # cap on the lane-dense last dim (multiple of 128)
_MIN_GRID_STEPS = 4            # target grid steps so ("parallel",) can split across TCs (v7x)
_MIN_BLOCK_BYTES = 256 << 10   # don't shrink per-array blocks below this when splitting
_PAD_PATH_MIN_BYTES = 4 << 20  # below this, ragged (non-128-divisible) arrays use XLA fallback


def _chip_budgets():
    """Per-generation VMEM budgets: v5e/v6e have 128 MiB VMEM, v7x has 64 MiB per TC."""
    vmem_cap = None
    try:
        info = pltpu.get_tpu_info()
        vmem_cap = getattr(info, "vmem_capacity_bytes", None)
    except Exception:
        vmem_cap = None
    if vmem_cap is None:
        vmem_cap = 64 << 20  # conservative (v7x-sized) default
    if vmem_cap >= (100 << 20):
        # v5e / v6e (128 MiB VMEM): generous double-buffered working set.
        return {"working_set": 64 << 20, "tile_cap": 8 << 20, "vmem_limit_cap": 96 << 20}
    # v7x (64 MiB per TensorCore): modest bump over the 32 MiB scoped default.
    return {"working_set": 40 << 20, "tile_cap": 4 << 20, "vmem_limit_cap": 56 << 20}


def _make_add_kernel(acc_dtype):
    def _add_kernel(*refs):
        """refs = (in_ref_0, ..., in_ref_{n-1}, out_ref). Sums all inputs elementwise."""
        *in_refs, out_ref = refs
        acc = in_refs[0][...].astype(acc_dtype)
        for r in in_refs[1:]:
            acc = acc + r[...].astype(acc_dtype)
        out_ref[...] = acc.astype(out_ref.dtype)
    return _add_kernel


def _pick_lane(total):
    """Largest multiple-of-128 divisor of `total`, capped at _MAX_LANE (None if none)."""
    for k in range(_MAX_LANE // 128, 0, -1):
        lane = 128 * k
        if total % lane == 0:
            return lane
    return None


def _pallas_sum_2d(flats, acc_dtype, *, allow_fusion=False):
    """Sum a list of identically shaped (rows, lane) arrays with a Pallas kernel."""
    n = len(flats)
    rows, lane = flats[0].shape
    dtype = flats[0].dtype
    itemsize = jnp.dtype(dtype).itemsize
    budgets = _chip_budgets()

    sublane = {1: 32, 2: 16}.get(itemsize, 8)   # sublane pack per dtype width

    # Per-array block bytes from the double-buffered working-set budget:
    #   2 * (n inputs + 1 output) * tile_bytes <= working_set
    tile_bytes = max(lane * sublane * itemsize,
                     min(budgets["tile_cap"], budgets["working_set"] // (2 * (n + 1))))
    tile_rows = max(sublane, (tile_bytes // (lane * itemsize)) // sublane * sublane)

    # Megacore (v7x): make sure a reasonably sized input is split into >= _MIN_GRID_STEPS
    # blocks so the "parallel" grid axis can be sharded across both TensorCores.
    if pl.cdiv(rows, tile_rows) < _MIN_GRID_STEPS:
        split_rows = (pl.cdiv(rows, _MIN_GRID_STEPS) // sublane) * sublane
        min_rows = max(sublane, _MIN_BLOCK_BYTES // (lane * itemsize))
        if split_rows >= min_rows:
            tile_rows = min(tile_rows, split_rows)

    tr = min(tile_rows, rows)
    # Prefer a tile that divides rows (no short ragged final block), as long as it does
    # not shrink the block by more than 2x.
    if rows % tr != 0 and tr > sublane:
        d = (tr // sublane) * sublane
        while d >= sublane and rows % d != 0:
            d -= sublane
        if d >= sublane and 2 * d >= tr:
            tr = d

    grid = (pl.cdiv(rows, tr),)
    spec = pl.BlockSpec((tr, lane), lambda i: (i, 0))

    # Double-buffered working set: 2 * (inputs + output) * tile bytes, with headroom.
    vmem_needed = 2 * (n + 1) * tr * lane * itemsize
    vmem_limit = min(budgets["vmem_limit_cap"],
                     max(16 << 20, int(vmem_needed * 3 // 2) + (1 << 20)))

    compiler_params = pltpu.CompilerParams(
        dimension_semantics=("parallel",),
        vmem_limit_bytes=vmem_limit,
        allow_input_fusion=([True] * n) if allow_fusion else None,
    )

    cost = pl.CostEstimate(
        flops=(n - 1) * rows * lane,
        transcendentals=0,
        bytes_accessed=(n + 1) * rows * lane * itemsize,
    )

    return pl.pallas_call(
        _make_add_kernel(acc_dtype),
        out_shape=jax.ShapeDtypeStruct((rows, lane), dtype),
        grid_spec=pltpu.PrefetchScalarGridSpec(
            num_scalar_prefetch=0,
            grid=grid,
            in_specs=[spec] * n,
            out_specs=spec,
        ),
        compiler_params=compiler_params,
        cost_estimate=cost,
    )(*flats)


def add_tensors(tensors, *, min_pallas_bytes=512 << 10):
    """Elementwise sum of a list of same-shape tensors (Pallas TPU kernel for large inputs).

    min_pallas_bytes: inputs smaller than this take the fused-XLA path (kernel launch
    overhead dwarfs the work for KB-sized arrays; XLA already fuses N-way adds at roofline).
    """
    n = len(tensors)
    assert n >= 1
    shape = tensors[0].shape
    dtype = tensors[0].dtype
    for t in tensors:
        assert t.shape == shape and t.dtype == dtype

    if n == 1:
        return tensors[0]

    total = int(math.prod(shape)) if len(shape) else 1
    if total == 0:
        return jnp.zeros(shape, dtype)

    itemsize = jnp.dtype(dtype).itemsize
    total_bytes = total * itemsize
    if total_bytes < min_pallas_bytes:
        return functools.reduce(lambda a, b: a + b, tensors)

    # Accumulation dtype: native dtype (bf16 VPU is native on v6e/v7x; ints stay exact in
    # their own dtype); only widen sub-32-bit floats when summing many tensors.
    if jnp.issubdtype(dtype, jnp.floating) and itemsize < 4 and n > 8:
        acc_dtype = jnp.float32
    else:
        acc_dtype = dtype

    lane = _pick_lane(total)
    if lane is not None:
        # Free (bitcast-level) reshape to a lane-dense 2D view: no padding, no output slice.
        rows = total // lane
        flats = [t.reshape(rows, lane) for t in tensors]
        out = _pallas_sum_2d(flats, acc_dtype)
        return out.reshape(shape)

    # Ragged total (not a multiple of 128).
    if total_bytes < _PAD_PATH_MIN_BYTES:
        # Small ragged arrays: padding would add full extra HBM passes; XLA handles this.
        return functools.reduce(lambda a, b: a + b, tensors)

    # Last resort for large ragged arrays: pad to a multiple of 128; allow_input_fusion lets
    # XLA fuse the pad into the Pallas input DMA instead of a separate materializing pass.
    padded_total = pl.cdiv(total, 128) * 128
    lane = _pick_lane(padded_total)
    rows = padded_total // lane
    flats = [
        jnp.pad(t.reshape(total), (0, padded_total - total)).reshape(rows, lane)
        for t in tensors
    ]
    out = _pallas_sum_2d(flats, acc_dtype, allow_fusion=True)
    return out.reshape(padded_total)[:total].reshape(shape)


if __name__ == "__main__":
    key = jax.random.PRNGKey(0)
    k1, k2, k3 = jax.random.split(key, 3)

    # Small NCHW test (matches the module's typical use); force the Pallas path.
    shape = (2, 4, 16, 16)
    tensors = [
        jax.random.normal(k1, shape, dtype=jnp.float32),
        jax.random.normal(k2, shape, dtype=jnp.float32),
        jax.random.normal(k3, shape, dtype=jnp.float32),
    ]
    result = add_tensors(tensors, min_pallas_bytes=0)
    jax.block_until_ready(result)
    ref = functools.reduce(lambda a, b: a + b, tensors)
    assert result.shape == shape and result.dtype == jnp.float32
    assert jnp.allclose(result, ref, atol=1e-6, rtol=1e-6), "mismatch vs reference (shape1)"

    # Slightly wider, lane-divisible test: 4 inputs, still small, Pallas path.
    shape3 = (2, 8, 16, 128)
    k6, k7, k8, k9 = jax.random.split(k3, 4)
    tensors3 = [
        jax.random.normal(kk, shape3, dtype=jnp.float32) for kk in (k6, k7, k8, k9)
    ]
    result3 = add_tensors(tensors3, min_pallas_bytes=0)
    jax.block_until_ready(result3)
    ref3 = functools.reduce(lambda a, b: a + b, tensors3)
    assert jnp.allclose(result3, ref3, atol=1e-5, rtol=1e-5), "mismatch vs reference (shape3)"

    # Odd-sized test: small ragged total -> exercises the XLA fallback path.
    shape2 = (2, 3, 17, 19)
    k4, k5 = jax.random.split(k3)
    tensors2 = [
        jax.random.normal(k4, shape2, dtype=jnp.float32),
        jax.random.normal(k5, shape2, dtype=jnp.float32),
    ]
    result2 = add_tensors(tensors2, min_pallas_bytes=0)
    jax.block_until_ready(result2)
    ref2 = tensors2[0] + tensors2[1]
    assert result2.shape == shape2
    assert jnp.allclose(result2, ref2, atol=1e-6, rtol=1e-6), "mismatch vs reference (shape2)"

    print("KERNEL_OK")
</pallas_src>

<mosaic_0001>
module attributes {stable_mosaic.version = 11 : i64} {
  func.func @_add_kernel(%arg0: i32, %arg1: memref<1x2048xf32, #tpu.memory_space<vmem>>, %arg2: memref<1x2048xf32, #tpu.memory_space<vmem>>, %arg3: memref<1x2048xf32, #tpu.memory_space<vmem>>, %arg4: memref<1x2048xf32, #tpu.memory_space<vmem>>) attributes {dimension_semantics = [#tpu.dimension_semantics<parallel>], iteration_bounds = array<i64: 1>, scalar_prefetch = 0 : i64, scratch_operands = 0 : i64, tpu.core_type = #tpu.core_type<tc>, window_params = [{transform_indices = @transform_0, window_bounds = array<i64: 1, 2048>}, {transform_indices = @transform_1, window_bounds = array<i64: 1, 2048>}, {transform_indices = @transform_2, window_bounds = array<i64: 1, 2048>}, {transform_indices = @transform_3, window_bounds = array<i64: 1, 2048>}]} {
    %c0 = arith.constant 0 : index
    %c0_0 = arith.constant 0 : index
    %0 = vector.load %arg1[%c0, %c0_0] : memref<1x2048xf32, #tpu.memory_space<vmem>>, vector<1x2048xf32>
    %c0_1 = arith.constant 0 : index
    %c0_2 = arith.constant 0 : index
    %1 = vector.load %arg2[%c0_1, %c0_2] : memref<1x2048xf32, #tpu.memory_space<vmem>>, vector<1x2048xf32>
    %2 = arith.addf %0, %1 : vector<1x2048xf32>
    %c0_3 = arith.constant 0 : index
    %c0_4 = arith.constant 0 : index
    %3 = vector.load %arg3[%c0_3, %c0_4] : memref<1x2048xf32, #tpu.memory_space<vmem>>, vector<1x2048xf32>
    %4 = arith.addf %2, %3 : vector<1x2048xf32>
    %c0_5 = arith.constant 0 : index
    %c0_6 = arith.constant 0 : index
    %5 = vector.load %arg4[%c0_5, %c0_6] : memref<1x2048xf32, #tpu.memory_space<vmem>>, vector<1x2048xf32>
    tpu.vector_store %arg4[%c0_5, %c0_6], %4 {strides = array<i32>} : memref<1x2048xf32, #tpu.memory_space<vmem>>, vector<1x2048xf32>,
    return
  }
  func.func @transform_0(%arg0: i32) -> (i32, i32) {
    %c0_i32 = arith.constant 0 : i32
    %c0_i32_0 = arith.constant 0 : i32
    return %arg0, %c0_i32 : i32, i32
  }
  func.func @transform_1(%arg0: i32) -> (i32, i32) {
    %c0_i32 = arith.constant 0 : i32
    %c0_i32_0 = arith.constant 0 : i32
    return %arg0, %c0_i32 : i32, i32
  }
  func.func @transform_2(%arg0: i32) -> (i32, i32) {
    %c0_i32 = arith.constant 0 : i32
    %c0_i32_0 = arith.constant 0 : i32
    return %arg0, %c0_i32 : i32, i32
  }
  func.func @transform_3(%arg0: i32) -> (i32, i32) {
    %c0_i32 = arith.constant 0 : i32
    %c0_i32_0 = arith.constant 0 : i32
    return %arg0, %c0_i32 : i32, i32
  }
}

</mosaic_0001>

<llo_original>
// kernel: tpu_custom_call.1
$region0: #{tpu_custom_call.1}
  #allocation0 [shape = 'u32[]', space=smem, size = 0x4, offset = 0x4, fixed_abs, tag = 'smem constant byte address 0x4 - core index']
  #allocation1 [shape = 'u32[144,128]{1,0:T(1,128)}', space=vmem, size = 0x12000, scoped, tag = 'internal scratch']
  %s0 = inlined_call_operand.hbm [shape: f32[1,2048], index: 0, kind: input, shape index: {}]
  %s1 = inlined_call_operand.hbm [shape: f32[1,2048], index: 1, kind: input, shape index: {}]
  %s2 = inlined_call_operand.hbm [shape: f32[1,2048], index: 2, kind: input, shape index: {}]
  %s3 = inlined_call_operand.hbm [shape: f32[1,2048], index: 3, kind: output, shape index: {}]
  %s4 = sld [smem:[#allocation0]]
  $region34: #{tpu_custom_call.1} parent=0
    _
  %s6 = ssub.s32 1, %s4
  %s7 = scalar_select 0, %s6, %s4
  $region1: #{tpu_custom_call.1} parent=0
    #allocation2 [shape = 'u8[8192]{0}', space=vmem, size = 0x2000, scoped, tag = 'input window, operand 0, single buffered']
    #allocation3 [shape = 's32[1]{0}', space=sflag, size = 0x4, scoped, tag = 'scoped memory for tpu_custom_call.1']
    #allocation4 [shape = 's32[1]{0}', space=sflag, size = 0x4, scoped, tag = 'scoped memory for tpu_custom_call.1']
    #allocation5 [shape = 'u8[8192]{0}', space=vmem, size = 0x2000, scoped, tag = 'input window, operand 1, single buffered']
    #allocation6 [shape = 's32[1]{0}', space=sflag, size = 0x4, scoped, tag = 'scoped memory for tpu_custom_call.1']
    #allocation7 [shape = 'u8[8192]{0}', space=vmem, size = 0x2000, scoped, tag = 'input window, operand 2, single buffered']
    #allocation8 [shape = 'u8[8192]{0}', space=vmem, size = 0x2000, scoped, tag = 'output window, operand 0, single buffered']
    %8 = vsyncpa [#allocation3], 0
    %9 = vsyncpa [#allocation6], 0
    %10 = vsyncpa [#allocation4], 0
    // Predicated region
    $region2: #{tpu_custom_call.1} parent=1 // pred_check
      _
    $region3: #{tpu_custom_call.1} parent=1 // pred_check_branch
      %12 = sbr.rel (0) target = $region5
    $region4: #{tpu_custom_call.1} parent=1 // pred_region
      %s14 = ssub.s32 256, 256
      %15 = vsyncadd [#allocation3], %s14
      %s17 = sshll.u32 [#allocation2], 4
      %s18 = int_to_ptr.vmem [resolvable:$true] %s17
      %20 = dma.hbm_to_vmem [thread:$0]  %s0, 256, %s18, [#allocation3]
    $region5: #{tpu_custom_call.1} parent=1 // pred_fallthru
      _
    // Predicated region
    $region6: #{tpu_custom_call.1} parent=1 // pred_check
      _
    $region7: #{tpu_custom_call.1} parent=1 // pred_check_branch
      %22 = sbr.rel (0) target = $region9
    $region8: #{tpu_custom_call.1} parent=1 // pred_region
      %s24 = ssub.s32 256, 256
      %25 = vsyncadd [#allocation6], %s24
      %s27 = sshll.u32 [#allocation5], 4
      %s28 = int_to_ptr.vmem [resolvable:$true] %s27
      %30 = dma.hbm_to_vmem [thread:$0]  %s1, 256, %s28, [#allocation6]
    $region9: #{tpu_custom_call.1} parent=1 // pred_fallthru
      _
    // Predicated region
    $region10: #{tpu_custom_call.1} parent=1 // pred_check
      _
    $region11: #{tpu_custom_call.1} parent=1 // pred_check_branch
      %32 = sbr.rel (0) target = $region13
    $region12: #{tpu_custom_call.1} parent=1 // pred_region
      %s34 = ssub.s32 256, 256
      %35 = vsyncadd [#allocation6], %s34
      %s37 = sshll.u32 [#allocation7], 4
      %s38 = int_to_ptr.vmem [resolvable:$true] %s37
      %40 = dma.hbm_to_vmem [thread:$0]  %s2, 256, %s38, [#allocation6]
    $region13: #{tpu_custom_call.1} parent=1 // pred_fallthru
      _
    // Predicated region
    $region14: #{tpu_custom_call.1} parent=1 // pred_check
      _
    $region15: #{tpu_custom_call.1} parent=1 // pred_check_branch
      %42 = sbr.rel (0) target = $region17
    $region16: #{tpu_custom_call.1} parent=1 // pred_region
      %43 = dma.done [#allocation3], 256
    $region17: #{tpu_custom_call.1} parent=1 // pred_fallthru
      _
    // Predicated region
    $region18: #{tpu_custom_call.1} parent=1 // pred_check
      _
    $region19: #{tpu_custom_call.1} parent=1 // pred_check_branch
      %45 = sbr.rel (0) target = $region21
    $region20: #{tpu_custom_call.1} parent=1 // pred_region
      %46 = dma.done [#allocation6], 256
    $region21: #{tpu_custom_call.1} parent=1 // pred_fallthru
      _
    // Predicated region
    $region22: #{tpu_custom_call.1} parent=1 // pred_check
      _
    $region23: #{tpu_custom_call.1} parent=1 // pred_check_branch
      %48 = sbr.rel (0) target = $region25
    $region24: #{tpu_custom_call.1} parent=1 // pred_region
      %49 = dma.done [#allocation6], 256
    $region25: #{tpu_custom_call.1} parent=1 // pred_fallthru
      _
    %v50 = vld [vmem:[#allocation2] sm:$0xff]
    %v51 = vld [vmem:[#allocation2 + $0x8] sm:$0xff]
    %v52 = vld [vmem:[#allocation5] sm:$0xff]
    %v53 = vld [vmem:[#allocation5 + $0x8] sm:$0xff]
    %v54 = vadd.f32 %v50, %v52
    %v55 = vadd.f32 %v51, %v53
    %v56 = vld [vmem:[#allocation7] sm:$0xff]
    %v57 = vld [vmem:[#allocation7 + $0x8] sm:$0xff]
    %v58 = vadd.f32 %v54, %v56
    %v59 = vadd.f32 %v55, %v57
    %60 = vst [vmem:[#allocation8] sm:$0xff] %v58
    %61 = vst [vmem:[#allocation8 + $0x8] sm:$0xff] %v59
    // Predicated region
    $region26: #{tpu_custom_call.1} parent=1 // pred_check
      _
    $region27: #{tpu_custom_call.1} parent=1 // pred_check_branch
      %63 = sbr.rel (0) target = $region29
    $region28: #{tpu_custom_call.1} parent=1 // pred_region
      %s65 = ssub.s32 256, 256
      %66 = vsyncadd [#allocation4], %s65
      %s68 = sshll.u32 [#allocation8], 4
      %s69 = int_to_ptr.vmem [resolvable:$true] %s68
      %71 = dma.vmem_to_hbm [thread:$0]  %s69, 256, %s3, [#allocation4]
    $region29: #{tpu_custom_call.1} parent=1 // pred_fallthru
      _
    // Predicated region
    $region30: #{tpu_custom_call.1} parent=1 // pred_check
      _
    $region31: #{tpu_custom_call.1} parent=1 // pred_check_branch
      %73 = sbr.rel (0) target = $region33
    $region32: #{tpu_custom_call.1} parent=1 // pred_region
      %74 = dma.done [#allocation4], 256
    $region33: #{tpu_custom_call.1} parent=1 // pred_fallthru
      _
    %75 = vsyncpa [#allocation3], 1
    %76 = vsyncpa [#allocation6], 1
    %77 = vsyncpa [#allocation4], 1

</llo_original>
